<compile_context>
chip_gen: v6e
topology: v6e:2x2x1
jax: 0.10.0
libtpu: 0.0.40
codegen_flags: <defaults>
</compile_context>

<pallas_src>
import jax
import jax.numpy as jnp
from jax import lax
from jax.experimental import pallas as pl
from jax.experimental.pallas import tpu as pltpu


def _make_fixed_loss_kernel(H, W, inv_total, inv_count_h, inv_count_w):
    """Kernel with static normalization constants baked in."""
    HW = H * W

    def kernel(if_asym_ref, out_ref, gt_ref, est_ref, gtn_ref, loss_ref):
        # if_asym_ref: (1,)                 SMEM  scalar weight for asym term
        # out/gt/est/gtn_ref: (rows, H*W)   VMEM  lane-dense row blocks
        # loss_ref: (1, 1)                  VMEM  resident accumulator output
        i = pl.program_id(0)

        @pl.when(i == 0)
        def _init():
            loss_ref[...] = jnp.zeros_like(loss_ref)

        # In-vreg upcast: HBM reads stay at the native input width.
        o = out_ref[...].astype(jnp.float32)
        g = gt_ref[...].astype(jnp.float32)
        e = est_ref[...].astype(jnp.float32)
        n = gtn_ref[...].astype(jnp.float32)

        if_asym = if_asym_ref[0]

        # ---- fused elementwise terms: MSE + asymmetric penalty -------------
        d_img = o - g
        d_n = n - e                                   # gt_noise - est_noise
        relu_d = jnp.maximum(d_n, 0.0)
        asym_elem = jnp.abs(0.3 - relu_d) * (d_n * d_n)
        val = (inv_total * (d_img * d_img)
               + ((0.5 * inv_total) * if_asym) * asym_elem)

        # ---- total variation on the lane-dense flat (rows, H*W) layout -----
        # vertical neighbour is at flat offset +W; every such pair is valid.
        dh = e[:, W:] - e[:, : HW - W]
        # horizontal neighbour is at flat offset +1; pairs that would cross an
        # image row (w == W-1) are masked out.
        dw = e[:, 1:] - e[:, : HW - 1]
        col = lax.broadcasted_iota(jnp.int32, dw.shape, 1)
        w_sq = jnp.where(col % W != W - 1, dw * dw, 0.0)

        partial = (jnp.sum(val, keepdims=True)
                   + (0.05 * inv_count_h) * jnp.sum(dh * dh, keepdims=True)
                   + (0.05 * inv_count_w) * jnp.sum(w_sq, keepdims=True))

        loss_ref[...] += partial

    return kernel


def _choose_block_rows(nc, row_bytes, target_block_bytes=1 << 20):
    """Largest multiple-of-8 divisor of nc whose block fits ~target bytes."""
    if nc % 8 != 0:
        return nc                        # full extent: always a legal block
    max_rows = max(8, ((target_block_bytes // max(row_bytes, 1)) // 8) * 8)
    best = 8
    d = 8
    while d <= min(nc, max_rows):
        if nc % d == 0:
            best = d
        d += 8
    return best


def fixed_loss_forward(out_image, gt_image, est_noise, gt_noise, if_asym,
                       *, block_rows=None):
    """Pallas implementation of fixed_loss.forward.

    out_image, gt_image, est_noise, gt_noise: (N, C, H, W) arrays (same shape)
    if_asym: python / 0-d scalar
    returns: scalar float32 loss
    """
    N, C, H, W = est_noise.shape
    NC = N * C
    HW = H * W
    total = N * C * H * W
    count_h = C * (H - 1) * W            # PyTorch _tensor_size drops batch dim
    count_w = C * H * (W - 1)

    inv_total = 1.0 / float(total)
    inv_count_h = 1.0 / float(count_h)
    inv_count_w = 1.0 / float(count_w)

    # Free, contiguous reshapes to the lane-dense (N*C, H*W) layout. Every row
    # is one full (H, W) image, so TV stays local to a row block.
    out2 = out_image.reshape(NC, HW)
    gt2 = gt_image.reshape(NC, HW)
    est2 = est_noise.reshape(NC, HW)
    gtn2 = gt_noise.reshape(NC, HW)

    if block_rows is None:
        block_rows = _choose_block_rows(NC, HW * est2.dtype.itemsize)
    assert NC % block_rows == 0 and (block_rows % 8 == 0 or block_rows == NC)
    nb = NC // block_rows

    if_asym_arr = jnp.asarray(if_asym, jnp.float32).reshape(1)

    kernel = _make_fixed_loss_kernel(H, W, inv_total, inv_count_h, inv_count_w)

    def row_block_spec():
        return pl.BlockSpec((block_rows, HW), lambda i: (i, 0))

    bytes_accessed = sum(int(a.size) * a.dtype.itemsize
                         for a in (out2, gt2, est2, gtn2)) + 8
    cost = pl.CostEstimate(flops=12 * total, transcendentals=0,
                           bytes_accessed=bytes_accessed)

    loss = pl.pallas_call(
        kernel,
        out_shape=jax.ShapeDtypeStruct((1, 1), jnp.float32),
        grid_spec=pltpu.PrefetchScalarGridSpec(
            num_scalar_prefetch=0,
            grid=(nb,),
            in_specs=[
                pl.BlockSpec(memory_space=pltpu.MemorySpace.SMEM),  # if_asym
                row_block_spec(),   # out_image
                row_block_spec(),   # gt_image
                row_block_spec(),   # est_noise
                row_block_spec(),   # gt_noise
            ],
            out_specs=pl.BlockSpec((1, 1), lambda i: (0, 0)),
        ),
        compiler_params=pltpu.CompilerParams(
            dimension_semantics=("arbitrary",)),
        cost_estimate=cost,
    )(if_asym_arr, out2, gt2, est2, gtn2)

    return loss[0, 0]


def fixed_loss_reference(out_image, gt_image, est_noise, gt_noise, if_asym):
    """Pure-JAX reference matching the PyTorch module exactly."""
    h_x = est_noise.shape[2]
    w_x = est_noise.shape[3]
    count_h = est_noise.shape[1] * (h_x - 1) * w_x
    count_w = est_noise.shape[1] * h_x * (w_x - 1)
    h_tv = jnp.sum((est_noise[:, :, 1:, :] - est_noise[:, :, :h_x - 1, :]) ** 2)
    w_tv = jnp.sum((est_noise[:, :, :, 1:] - est_noise[:, :, :, :w_x - 1]) ** 2)
    tvloss = h_tv / count_h + w_tv / count_w
    asym = jnp.mean(jnp.abs(0.3 - jax.nn.relu(gt_noise - est_noise))
                    * (est_noise - gt_noise) ** 2)
    return (jnp.mean((out_image - gt_image) ** 2)
            + if_asym * 0.5 * asym + 0.05 * tvloss)


if __name__ == "__main__":
    key = jax.random.PRNGKey(0)
    k = jax.random.split(key, 8)

    # Case 1: suggested small shape (single row block).
    N, C, H, W = 2, 4, 16, 16
    out_image = jax.random.normal(k[0], (N, C, H, W), dtype=jnp.float32)
    gt_image = jax.random.normal(k[1], (N, C, H, W), dtype=jnp.float32)
    est_noise = 0.1 * jax.random.normal(k[2], (N, C, H, W), dtype=jnp.float32)
    gt_noise = 0.1 * jax.random.normal(k[3], (N, C, H, W), dtype=jnp.float32)
    if_asym = 1.0

    loss = jax.block_until_ready(
        fixed_loss_forward(out_image, gt_image, est_noise, gt_noise, if_asym))
    ref = jax.block_until_ready(
        fixed_loss_reference(out_image, gt_image, est_noise, gt_noise, if_asym))
    assert loss.shape == ()
    assert jnp.allclose(loss, ref, rtol=1e-5, atol=1e-5), (loss, ref)

    # Case 2: larger N*C with forced block_rows=8 -> 4 grid steps, exercising
    # the streamed init/accumulate path of the grid.
    N2, C2 = 4, 8
    out_b = jax.random.normal(k[4], (N2, C2, H, W), dtype=jnp.float32)
    gt_b = jax.random.normal(k[5], (N2, C2, H, W), dtype=jnp.float32)
    est_b = 0.1 * jax.random.normal(k[6], (N2, C2, H, W), dtype=jnp.float32)
    gtn_b = 0.1 * jax.random.normal(k[7], (N2, C2, H, W), dtype=jnp.float32)
    if_asym2 = 0.3

    loss2 = jax.block_until_ready(
        fixed_loss_forward(out_b, gt_b, est_b, gtn_b, if_asym2, block_rows=8))
    ref2 = jax.block_until_ready(
        fixed_loss_reference(out_b, gt_b, est_b, gtn_b, if_asym2))
    assert jnp.allclose(loss2, ref2, rtol=1e-5, atol=1e-5), (loss2, ref2)

    print("KERNEL_OK")
</pallas_src>

<mosaic_0001>
module attributes {stable_mosaic.version = 11 : i64} {
  func.func @kernel(%arg0: i32, %arg1: memref<1xf32, #tpu.memory_space<smem>>, %arg2: memref<8x256xf32, #tpu.memory_space<vmem>>, %arg3: memref<8x256xf32, #tpu.memory_space<vmem>>, %arg4: memref<8x256xf32, #tpu.memory_space<vmem>>, %arg5: memref<8x256xf32, #tpu.memory_space<vmem>>, %arg6: memref<1x1xf32, #tpu.memory_space<vmem>>) attributes {dimension_semantics = [#tpu.dimension_semantics<arbitrary>], iteration_bounds = array<i64: 1>, scalar_prefetch = 0 : i64, scratch_operands = 0 : i64, tpu.core_type = #tpu.core_type<tc>, window_params = [{transform_indices = @transform_0, window_bounds = array<i64: 1>}, {transform_indices = @transform_1, window_bounds = array<i64: 8, 256>}, {transform_indices = @transform_2, window_bounds = array<i64: 8, 256>}, {transform_indices = @transform_3, window_bounds = array<i64: 8, 256>}, {transform_indices = @transform_4, window_bounds = array<i64: 8, 256>}, {pipeline_mode = #tpu.pipeline_mode<synchronous>, transform_indices = @transform_5, window_bounds = array<i64: 1, 1>}]} {
    %c0_i32 = arith.constant 0 : i32
    %0 = arith.cmpi eq, %arg0, %c0_i32 : i32
    %1 = arith.extui %0 : i1 to i32
    %c0_i32_0 = arith.constant 0 : i32
    %2 = arith.cmpi ne, %1, %c0_i32_0 : i32
    scf.if %2 {
      %cst_26 = arith.constant 0.000000e+00 : f32
      %77 = vector.broadcast %cst_26 : f32 to vector<1x1xf32>
      %c0_27 = arith.constant 0 : index
      %c0_28 = arith.constant 0 : index
      %78 = vector.load %arg6[%c0_27, %c0_28] : memref<1x1xf32, #tpu.memory_space<vmem>>, vector<1x1xf32>
      tpu.vector_store %arg6[%c0_27, %c0_28], %77 {strides = array<i32>} : memref<1x1xf32, #tpu.memory_space<vmem>>, vector<1x1xf32>,
    } else {
    }
    %c0 = arith.constant 0 : index
    %c0_1 = arith.constant 0 : index
    %3 = vector.load %arg2[%c0, %c0_1] : memref<8x256xf32, #tpu.memory_space<vmem>>, vector<8x256xf32>
    %c0_2 = arith.constant 0 : index
    %c0_3 = arith.constant 0 : index
    %4 = vector.load %arg3[%c0_2, %c0_3] : memref<8x256xf32, #tpu.memory_space<vmem>>, vector<8x256xf32>
    %c0_4 = arith.constant 0 : index
    %c0_5 = arith.constant 0 : index
    %5 = vector.load %arg4[%c0_4, %c0_5] : memref<8x256xf32, #tpu.memory_space<vmem>>, vector<8x256xf32>
    %c0_6 = arith.constant 0 : index
    %c0_7 = arith.constant 0 : index
    %6 = vector.load %arg5[%c0_6, %c0_7] : memref<8x256xf32, #tpu.memory_space<vmem>>, vector<8x256xf32>
    %c0_8 = arith.constant 0 : index
    %7 = memref.load %arg1[%c0_8] : memref<1xf32, #tpu.memory_space<smem>>
    %8 = arith.subf %3, %4 : vector<8x256xf32>
    %9 = arith.subf %6, %5 : vector<8x256xf32>
    %cst = arith.constant 0.000000e+00 : f32
    %10 = vector.broadcast %cst : f32 to vector<8x256xf32>
    %11 = arith.maximumf %9, %10 : vector<8x256xf32>
    %cst_9 = arith.constant 3.000000e-01 : f32
    %12 = vector.broadcast %cst_9 : f32 to vector<8x256xf32>
    %13 = arith.subf %12, %11 : vector<8x256xf32>
    %14 = math.absf %13 : vector<8x256xf32>
    %15 = arith.mulf %9, %9 : vector<8x256xf32>
    %16 = arith.mulf %14, %15 : vector<8x256xf32>
    %17 = arith.mulf %8, %8 : vector<8x256xf32>
    %cst_10 = arith.constant 4.8828125E-4 : f32
    %18 = vector.broadcast %cst_10 : f32 to vector<8x256xf32>
    %19 = arith.mulf %18, %17 : vector<8x256xf32>
    %cst_11 = arith.constant 2.44140625E-4 : f32
    %20 = arith.mulf %cst_11, %7 : f32
    %21 = vector.broadcast %20 : f32 to vector<8x256xf32>
    %22 = arith.mulf %21, %16 : vector<8x256xf32>
    %23 = arith.addf %19, %22 : vector<8x256xf32>
    %24 = vector.extract_strided_slice %5 {offsets = [0, 16], sizes = [8, 240], strides = [1, 1]} : vector<8x256xf32> to vector<8x240xf32>
    %25 = vector.extract_strided_slice %5 {offsets = [0, 0], sizes = [8, 240], strides = [1, 1]} : vector<8x256xf32> to vector<8x240xf32>
    %26 = arith.subf %24, %25 : vector<8x240xf32>
    %27 = vector.extract_strided_slice %5 {offsets = [0, 1], sizes = [8, 255], strides = [1, 1]} : vector<8x256xf32> to vector<8x255xf32>
    %28 = vector.extract_strided_slice %5 {offsets = [0, 0], sizes = [8, 255], strides = [1, 1]} : vector<8x256xf32> to vector<8x255xf32>
    %29 = arith.subf %27, %28 : vector<8x255xf32>
    %30 = tpu.iota {dimensions = array<i32: 1>} : vector<8x255xi32>
    %c16_i32 = arith.constant 16 : i32
    %c0_i32_12 = arith.constant 0 : i32
    %31 = arith.cmpi eq, %c16_i32, %c0_i32_12 : i32
    %c1_i32 = arith.constant 1 : i32
    %32 = arith.select %31, %c1_i32, %c16_i32 : i32
    %33 = vector.broadcast %32 : i32 to vector<8x255xi32>
    %34 = arith.remsi %30, %33 : vector<8x255xi32>
    %c0_i32_13 = arith.constant 0 : i32
    %35 = vector.broadcast %c0_i32_13 : i32 to vector<8x255xi32>
    %36 = arith.cmpi ne, %34, %35 : vector<8x255xi32>
    %c0_i32_14 = arith.constant 0 : i32
    %37 = vector.broadcast %c0_i32_14 : i32 to vector<8x255xi32>
    %38 = arith.cmpi slt, %34, %37 : vector<8x255xi32>
    %c0_i32_15 = arith.constant 0 : i32
    %39 = arith.cmpi slt, %32, %c0_i32_15 : i32
    %40 = vector.broadcast %39 : i1 to vector<8x255xi1>
    %41 = vector.broadcast %40 : vector<8x255xi1> to vector<8x255xi1>
    %42 = arith.xori %38, %41 : vector<8x255xi1>
    %43 = arith.andi %42, %36 : vector<8x255xi1>
    %44 = vector.broadcast %32 : i32 to vector<8x255xi32>
    %45 = arith.addi %34, %44 : vector<8x255xi32>
    %46 = arith.select %43, %45, %34 : vector<8x255xi1>, vector<8x255xi32>
    %c15_i32 = arith.constant 15 : i32
    %47 = vector.broadcast %c15_i32 : i32 to vector<8x255xi32>
    %48 = arith.cmpi ne, %46, %47 : vector<8x255xi32>
    %49 = arith.mulf %29, %29 : vector<8x255xf32>
    %cst_16 = arith.constant 0.000000e+00 : f32
    %50 = vector.broadcast %cst_16 : f32 to vector<8x255xf32>
    %51 = arith.select %48, %49, %50 : vector<8x255xi1>, vector<8x255xf32>
    %52 = vector.shape_cast %23 : vector<8x256xf32> to vector<1x8x256xf32>
    %cst_17 = arith.constant dense<0.000000e+00> : vector<1xf32>
    %53 = vector.multi_reduction <add>, %52, %cst_17 [1, 2] : vector<1x8x256xf32> to vector<1xf32>
    %54 = vector.shape_cast %53 : vector<1xf32> to vector<1x1x1xf32>
    %55 = vector.extract %54[0, 0, 0] : f32 from vector<1x1x1xf32>
    %56 = vector.broadcast %55 : f32 to vector<1x1xf32>
    %57 = arith.mulf %26, %26 : vector<8x240xf32>
    %58 = vector.shape_cast %57 : vector<8x240xf32> to vector<1x8x240xf32>
    %cst_18 = arith.constant dense<0.000000e+00> : vector<1xf32>
    %59 = vector.multi_reduction <add>, %58, %cst_18 [1, 2] : vector<1x8x240xf32> to vector<1xf32>
    %60 = vector.shape_cast %59 : vector<1xf32> to vector<1x1x1xf32>
    %61 = vector.extract %60[0, 0, 0] : f32 from vector<1x1x1xf32>
    %62 = vector.broadcast %61 : f32 to vector<1x1xf32>
    %cst_19 = arith.constant 5.20833346E-5 : f32
    %63 = vector.broadcast %cst_19 : f32 to vector<1x1xf32>
    %64 = arith.mulf %63, %62 : vector<1x1xf32>
    %65 = arith.addf %56, %64 : vector<1x1xf32>
    %66 = vector.shape_cast %51 : vector<8x255xf32> to vector<1x8x255xf32>
    %cst_20 = arith.constant dense<0.000000e+00> : vector<1xf32>
    %67 = vector.multi_reduction <add>, %66, %cst_20 [1, 2] : vector<1x8x255xf32> to vector<1xf32>
    %68 = vector.shape_cast %67 : vector<1xf32> to vector<1x1x1xf32>
    %69 = vector.extract %68[0, 0, 0] : f32 from vector<1x1x1xf32>
    %70 = vector.broadcast %69 : f32 to vector<1x1xf32>
    %cst_21 = arith.constant 5.20833346E-5 : f32
    %71 = vector.broadcast %cst_21 : f32 to vector<1x1xf32>
    %72 = arith.mulf %71, %70 : vector<1x1xf32>
    %73 = arith.addf %65, %72 : vector<1x1xf32>
    %c0_22 = arith.constant 0 : index
    %c0_23 = arith.constant 0 : index
    %74 = vector.load %arg6[%c0_22, %c0_23] : memref<1x1xf32, #tpu.memory_space<vmem>>, vector<1x1xf32>
    %75 = arith.addf %74, %73 : vector<1x1xf32>
    %c0_24 = arith.constant 0 : index
    %c0_25 = arith.constant 0 : index
    %76 = vector.load %arg6[%c0_24, %c0_25] : memref<1x1xf32, #tpu.memory_space<vmem>>, vector<1x1xf32>
    tpu.vector_store %arg6[%c0_24, %c0_25], %75 {strides = array<i32>} : memref<1x1xf32, #tpu.memory_space<vmem>>, vector<1x1xf32>,
    return
  }
  func.func @transform_0(%arg0: i32) -> i32 {
    %c0_i32 = arith.constant 0 : i32
    %c0_i32_0 = arith.constant 0 : i32
    return %c0_i32 : i32
  }
  func.func @transform_1(%arg0: i32) -> (i32, i32) {
    %c0_i32 = arith.constant 0 : i32
    %c0_i32_0 = arith.constant 0 : i32
    return %arg0, %c0_i32 : i32, i32
  }
  func.func @transform_2(%arg0: i32) -> (i32, i32) {
    %c0_i32 = arith.constant 0 : i32
    %c0_i32_0 = arith.constant 0 : i32
    return %arg0, %c0_i32 : i32, i32
  }
  func.func @transform_3(%arg0: i32) -> (i32, i32) {
    %c0_i32 = arith.constant 0 : i32
    %c0_i32_0 = arith.constant 0 : i32
    return %arg0, %c0_i32 : i32, i32
  }
  func.func @transform_4(%arg0: i32) -> (i32, i32) {
    %c0_i32 = arith.constant 0 : i32
    %c0_i32_0 = arith.constant 0 : i32
    return %arg0, %c0_i32 : i32, i32
  }
  func.func @transform_5(%arg0: i32) -> (i32, i32) {
    %c0_i32 = arith.constant 0 : i32
    %c0_i32_0 = arith.constant 0 : i32
    %c0_i32_1 = arith.constant 0 : i32
    return %c0_i32, %c0_i32_0 : i32, i32
  }
}

</mosaic_0001>

<llo_original>
// kernel: tpu_custom_call.1
$region0: #{tpu_custom_call.1}
  #allocation0 [shape = 'u32[]', space=smem, size = 0x4, offset = 0x4, fixed_abs, tag = 'smem constant byte address 0x4 - core index']
  #allocation1 [shape = 'u32[144,128]{1,0:T(1,128)}', space=vmem, size = 0x12000, scoped, tag = 'internal scratch']
  #allocation2 [shape = 'f32[1]{0:T(128)S(6)}', space=smem, size = 0x200, scoped, tag = 'scoped memory for tpu_custom_call.1']
  %s0 = inlined_call_operand.<no memory space> [shape: f32[1], index: 0, kind: input, shape index: {}]
  %s1 = inlined_call_operand.hbm [shape: f32[8,256], index: 1, kind: input, shape index: {}]
  %s2 = inlined_call_operand.hbm [shape: f32[8,256], index: 2, kind: input, shape index: {}]
  %s3 = inlined_call_operand.hbm [shape: f32[8,256], index: 3, kind: input, shape index: {}]
  %s4 = inlined_call_operand.hbm [shape: f32[8,256], index: 4, kind: input, shape index: {}]
  %s5 = inlined_call_operand.hbm [shape: f32[1,1], index: 5, kind: output, shape index: {}]
  %s6 = sld [smem:[#allocation0]]
  $region50: #{tpu_custom_call.1} parent=0
    _
  %s8 = ssub.s32 1, %s6
  %s9 = scalar_select 0, %s8, %s6
  %10 = sst [smem:[#allocation2]] %s0
  $region1: #{tpu_custom_call.1} parent=0
    #allocation3 [shape = 'u8[8192]{0}', space=vmem, size = 0x2000, scoped, tag = 'input window, operand 1, single buffered']
    #allocation4 [shape = 's32[1]{0}', space=sflag, size = 0x4, scoped, tag = 'scoped memory for tpu_custom_call.1']
    #allocation5 [shape = 's32[1]{0}', space=sflag, size = 0x4, scoped, tag = 'scoped memory for tpu_custom_call.1']
    #allocation6 [shape = 'u8[8192]{0}', space=vmem, size = 0x2000, scoped, tag = 'input window, operand 2, single buffered']
    #allocation7 [shape = 's32[1]{0}', space=sflag, size = 0x4, scoped, tag = 'scoped memory for tpu_custom_call.1']
    #allocation8 [shape = 'u8[8192]{0}', space=vmem, size = 0x2000, scoped, tag = 'input window, operand 3, single buffered']
    #allocation9 [shape = 'u8[8192]{0}', space=vmem, size = 0x2000, scoped, tag = 'input window, operand 4, single buffered']
    #allocation10 [shape = 's32[1]{0}', space=sflag, size = 0x4, scoped, tag = 'scoped memory for tpu_custom_call.1']
    #allocation11 [shape = 'u8[512]{0}', space=vmem, size = 0x400, scoped, tag = 'output window, operand 0, single buffered']
    %11 = vsyncpa [#allocation4], 0
    %12 = vsyncpa [#allocation7], 0
    %13 = vsyncpa [#allocation10], 0
    %14 = vsyncpa [#allocation5], 0
    // Predicated region
    $region2: #{tpu_custom_call.1} parent=1 // pred_check
      _
    $region3: #{tpu_custom_call.1} parent=1 // pred_check_branch
      %16 = sbr.rel (0) target = $region5
    $region4: #{tpu_custom_call.1} parent=1 // pred_region
      _
    $region5: #{tpu_custom_call.1} parent=1 // pred_fallthru
      _
    // Predicated region
    $region6: #{tpu_custom_call.1} parent=1 // pred_check
      _
    $region7: #{tpu_custom_call.1} parent=1 // pred_check_branch
      %18 = sbr.rel (0) target = $region9
    $region8: #{tpu_custom_call.1} parent=1 // pred_region
      %s20 = ssub.s32 256, 256
      %21 = vsyncadd [#allocation4], %s20
      %s23 = sshll.u32 [#allocation3], 4
      %s24 = int_to_ptr.vmem [resolvable:$true] %s23
      %26 = dma.hbm_to_vmem [thread:$0]  %s1, 256, %s24, [#allocation4]
    $region9: #{tpu_custom_call.1} parent=1 // pred_fallthru
      _
    // Predicated region
    $region10: #{tpu_custom_call.1} parent=1 // pred_check
      _
    $region11: #{tpu_custom_call.1} parent=1 // pred_check_branch
      %28 = sbr.rel (0) target = $region13
    $region12: #{tpu_custom_call.1} parent=1 // pred_region
      %s30 = ssub.s32 256, 256
      %31 = vsyncadd [#allocation7], %s30
      %s33 = sshll.u32 [#allocation6], 4
      %s34 = int_to_ptr.vmem [resolvable:$true] %s33
      %36 = dma.hbm_to_vmem [thread:$0]  %s2, 256, %s34, [#allocation7]
    $region13: #{tpu_custom_call.1} parent=1 // pred_fallthru
      _
    // Predicated region
    $region14: #{tpu_custom_call.1} parent=1 // pred_check
      _
    $region15: #{tpu_custom_call.1} parent=1 // pred_check_branch
      %38 = sbr.rel (0) target = $region17
    $region16: #{tpu_custom_call.1} parent=1 // pred_region
      %s40 = ssub.s32 256, 256
      %41 = vsyncadd [#allocation7], %s40
      %s43 = sshll.u32 [#allocation8], 4
      %s44 = int_to_ptr.vmem [resolvable:$true] %s43
      %46 = dma.hbm_to_vmem [thread:$0]  %s3, 256, %s44, [#allocation7]
    $region17: #{tpu_custom_call.1} parent=1 // pred_fallthru
      _
    // Predicated region
    $region18: #{tpu_custom_call.1} parent=1 // pred_check
      _
    $region19: #{tpu_custom_call.1} parent=1 // pred_check_branch
      %48 = sbr.rel (0) target = $region21
    $region20: #{tpu_custom_call.1} parent=1 // pred_region
      %s50 = ssub.s32 256, 256
      %51 = vsyncadd [#allocation10], %s50
      %s53 = sshll.u32 [#allocation9], 4
      %s54 = int_to_ptr.vmem [resolvable:$true] %s53
      %56 = dma.hbm_to_vmem [thread:$0]  %s4, 256, %s54, [#allocation10]
    $region21: #{tpu_custom_call.1} parent=1 // pred_fallthru
      _
    // Predicated region
    $region22: #{tpu_custom_call.1} parent=1 // pred_check
      _
    $region23: #{tpu_custom_call.1} parent=1 // pred_check_branch
      %58 = sbr.rel (0) target = $region25
    $region24: #{tpu_custom_call.1} parent=1 // pred_region
      %59 = dma.done [#allocation4], 256
    $region25: #{tpu_custom_call.1} parent=1 // pred_fallthru
      _
    // Predicated region
    $region26: #{tpu_custom_call.1} parent=1 // pred_check
      _
    $region27: #{tpu_custom_call.1} parent=1 // pred_check_branch
      %61 = sbr.rel (0) target = $region29
    $region28: #{tpu_custom_call.1} parent=1 // pred_region
      %62 = dma.done [#allocation7], 256
    $region29: #{tpu_custom_call.1} parent=1 // pred_fallthru
      _
    // Predicated region
    $region30: #{tpu_custom_call.1} parent=1 // pred_check
      _
    $region31: #{tpu_custom_call.1} parent=1 // pred_check_branch
      %64 = sbr.rel (0) target = $region33
    $region32: #{tpu_custom_call.1} parent=1 // pred_region
      %65 = dma.done [#allocation7], 256
    $region33: #{tpu_custom_call.1} parent=1 // pred_fallthru
      _
    // Predicated region
    $region34: #{tpu_custom_call.1} parent=1 // pred_check
      _
    $region35: #{tpu_custom_call.1} parent=1 // pred_check_branch
      %67 = sbr.rel (0) target = $region37
    $region36: #{tpu_custom_call.1} parent=1 // pred_region
      %68 = dma.done [#allocation10], 256
    $region37: #{tpu_custom_call.1} parent=1 // pred_fallthru
      _
    %p69 = scmp.eq.s32.totalorder 0, 0
    // Predicated region
    $region38: #{tpu_custom_call.1} parent=1 // pred_check
      %p70 = pneg %p69
    $region39: #{tpu_custom_call.1} parent=1 // pred_check_branch
      %72 = sbr.rel (%p70) target = $region41
    $region40: #{tpu_custom_call.1} parent=1 // pred_region
      %vm73 = vcmask 0
      %74 = vst.msk [vmem:[#allocation11] sm:$0x1] %vm73, 0.0
    $region41: #{tpu_custom_call.1} parent=1 // pred_fallthru
      _
    %v75 = vld [vmem:[#allocation3] sm:$0xff]
    %v76 = vld [vmem:[#allocation3 + $0x8] sm:$0xff]
    %v77 = vld [vmem:[#allocation6] sm:$0xff]
    %v78 = vld [vmem:[#allocation6 + $0x8] sm:$0xff]
    %v79 = vld [vmem:[#allocation8] sm:$0xff]
    %v80 = vld [vmem:[#allocation8 + $0x8] sm:$0xff]
    %v81 = vld [vmem:[#allocation9] sm:$0xff]
    %v82 = vld [vmem:[#allocation9 + $0x8] sm:$0xff]
    %s83 = sld [smem:[#allocation2]]
    %v84 = vsub.f32 %v75, %v77
    %v85 = vsub.f32 %v76, %v78
    %v86 = vsub.f32 %v81, %v79
    %v87 = vsub.f32 %v82, %v80
    %v88 = vmax.f32 %v86, 0.0
    %v89 = vmax.f32 %v87, 0.0
    %v90 = vsub.f32 0.3, %v88
    %v91 = vsub.f32 0.3, %v89
    %v92 = vand.u32 2147483647, %v90
    %v93 = vand.u32 2147483647, %v91
    %v94 = vmul.f32 %v86, %v86
    %v95 = vmul.f32 %v87, %v87
    %v96 = vmul.f32 %v92, %v94
    %v97 = vmul.f32 %v93, %v95
    %v98 = vmul.f32 %v84, %v84
    %v99 = vmul.f32 %v85, %v85
    %v100 = vmul.f32 %v98, 0.00048828125
    %v101 = vmul.f32 %v99, 0.00048828125
    %s102 = smul.f32 %s83, 0.00024414063
    %v103 = vstv %s102
    %v104 = vmul.f32 %v103, %v96
    %v105 = vmul.f32 %v103, %v97
    %v106 = vadd.f32 %v100, %v104
    %v107 = vadd.f32 %v101, %v105
    %110 = vrot.lane.b32.xlu0 %v79, 16
    %v111 = vpop.permute.xlu0 %110
    %112 = vrot.lane.b32.xlu0 %v80, 16
    %v113 = vpop.permute.xlu0 %112
    %vm114 = vcmask 130048
    %v115 = vsel %vm114, %v111, %v113
    %v118 = vsub.f32 %v79, %v111
    %v119 = vsub.f32 %v80, %v115
    %120 = vrot.lane.b32.xlu0 %v79, 1
    %v121 = vpop.permute.xlu0 %120
    %122 = vrot.lane.b32.xlu0 %v80, 1
    %v123 = vpop.permute.xlu0 %122
    %vm124 = vcmask 7168
    %v125 = vsel %vm124, %v121, %v123
    %v128 = vsub.f32 %v79, %v121
    %v129 = vsub.f32 %v80, %v125
    %v130 = vlaneseq
    %v131 = vand.u32 %v130, 127
    %v132 = vadd.s32 %v131, 128
    %vm133 = vcmp.lt.s32.totalorder %v131, 0
    %v134 = vsub.s32 0, %v131
    %v135 = vsel %vm133, %v134, %v131
    %v136 = vshrl.u32 %v135, 4
    %v137 = vand.u32 %v135, 15
    %v138 = vsub.s32 0, %v137
    %v139 = vsel %vm133, %v138, %v137
    %vm140 = vcmp.lt.s32.totalorder %v132, 0
    %v141 = vsub.s32 0, %v132
    %v142 = vsel %vm140, %v141, %v132
    %v143 = vshrl.u32 %v142, 4
    %v144 = vand.u32 %v142, 15
    %v145 = vsub.s32 0, %v144
    %v146 = vsel %vm140, %v145, %v144
    %vm147 = vcmp.ne.s32.totalorder %v139, 0
    %vm148 = vcmp.ne.s32.totalorder %v146, 0
    %vm149 = vcmp.lt.s32.totalorder %v139, 0
    %vm150 = vcmp.lt.s32.totalorder %v146, 0
    %vm151 = vmand %vm149, %vm147
    %vm152 = vmand %vm150, %vm148
    %v153 = vadd.s32 %v139, 16
    %v154 = vadd.s32 %v146, 16
    %v155 = vsel %vm151, %v153, %v139
    %v156 = vsel %vm152, %v154, %v146
    %vm157 = vcmp.ne.s32.totalorder %v155, 15
    %vm158 = vcmp.ne.s32.totalorder %v156, 15
    %v159 = vmul.f32 %v128, %v128
    %v160 = vmul.f32 %v129, %v129
    %163 = vrot.lane.b32.xlu0 %v159, 127
    %v164 = vpop.permute.xlu0 %163
    %165 = vrot.lane.b32.xlu0 %v160, 127
    %v166 = vpop.permute.xlu0 %165
    %vm167 = vcmask 1039360
    %v168 = vsel %vm167, %v164, %v166
    %v171 = vsel %vm157, %v168, 0.0
    %v172 = vsel %vm158, %v166, 0.0
    %v173 = vadd.f32 %v106, %v107
    %174 = vadd.xlane.f32.xlu0 %v173
    %v175 = vpop.xlane.xlu0 %174
    %v176 = vrot.slane %v175, 4
    %v177 = vadd.f32 %v175, %v176
    %v178 = vrot.slane %v177, 2
    %v179 = vadd.f32 %v177, %v178
    %v180 = vrot.slane %v179, 1
    %v181 = vadd.f32 %v179, %v180
    %s182 = vtos %v181
    %v183 = vstv %s182
    %v184 = vmul.f32 %v118, %v118
    %v185 = vmul.f32 %v119, %v119
    %188 = vrot.lane.b32.xlu0 %v184, 112
    %v189 = vpop.permute.xlu0 %188
    %190 = vrot.lane.b32.xlu0 %v185, 112
    %v191 = vpop.permute.xlu0 %190
    %vm192 = vcmask 916480
    %v193 = vsel %vm192, %v189, %v191
    %v196 = vsel %vm192, %v191, 0.0
    %v197 = vadd.f32 %v193, %v196
    %198 = vadd.xlane.f32.xlu0 %v197
    %v199 = vpop.xlane.xlu0 %198
    %v200 = vrot.slane %v199, 4
    %v201 = vadd.f32 %v199, %v200
    %v202 = vrot.slane %v201, 2
    %v203 = vadd.f32 %v201, %v202
    %v204 = vrot.slane %v203, 1
    %v205 = vadd.f32 %v203, %v204
    %s206 = vtos %v205
    %v207 = vstv %s206
    %v208 = vmul.f32 %v207, 5.2083335e-05
    %v209 = vadd.f32 %v183, %v208
    %v210 = vsel %vm167, %v172, 0.0
    %v211 = vadd.f32 %v171, %v210
    %212 = vadd.xlane.f32.xlu0 %v211
    %v213 = vpop.xlane.xlu0 %212
    %v214 = vrot.slane %v213, 4
    %v215 = vadd.f32 %v213, %v214
    %v216 = vrot.slane %v215, 2
    %v217 = vadd.f32 %v215, %v216
    %v218 = vrot.slane %v217, 1
    %v219 = vadd.f32 %v217, %v218
    %s220 = vtos %v219
    %v221 = vstv %s220
    %v222 = vmul.f32 %v221, 5.2083335e-05
    %v223 = vadd.f32 %v209, %v222
    %v224 = vld [vmem:[#allocation11] sm:$0x1]
    %v225 = vadd.f32 %v224, %v223
    %vm226 = vcmask 0
    %227 = vst.msk [vmem:[#allocation11] sm:$0x1] %vm226, %v225
    // Predicated region
    $region42: #{tpu_custom_call.1} parent=1 // pred_check
      _
    $region43: #{tpu_custom_call.1} parent=1 // pred_check_branch
      %229 = sbr.rel (0) target = $region45
    $region44: #{tpu_custom_call.1} parent=1 // pred_region
      %s231 = ssub.s32 16, 16
      %232 = vsyncadd [#allocation5], %s231
      %s234 = sshll.u32 [#allocation11], 4
      %s235 = int_to_ptr.vmem [resolvable:$true] %s234
      %237 = dma.vmem_to_hbm [thread:$0]  %s235, 16, %s5, [#allocation5]
    $region45: #{tpu_custom_call.1} parent=1 // pred_fallthru
      _
    // Predicated region
    $region46: #{tpu_custom_call.1} parent=1 // pred_check
      _
    $region47: #{tpu_custom_call.1} parent=1 // pred_check_branch
      %239 = sbr.rel (0) target = $region49
    $region48: #{tpu_custom_call.1} parent=1 // pred_region
      %240 = dma.done [#allocation5], 16
    $region49: #{tpu_custom_call.1} parent=1 // pred_fallthru
      _
    %241 = vsyncpa [#allocation4], 1
    %242 = vsyncpa [#allocation7], 1
    %243 = vsyncpa [#allocation10], 1
    %244 = vsyncpa [#allocation5], 1

</llo_original>
